<compile_context>
chip_gen: v5e
topology: v5e:2x2
jax: 0.10.0
libtpu: 0.0.40
codegen_flags: <defaults>
</compile_context>

<pallas_src>
import functools

import jax
import jax.numpy as jnp
from jax.experimental import pallas as pl
from jax.experimental.pallas import tpu as pltpu


def _layernorm2d_kernel(x_ref, w_ref, b_ref, o_ref, *, eps: float):
    # x_ref / o_ref: (Nb, C, T)   w_ref / b_ref: (C, 1)
    x = x_ref[...].astype(jnp.float32)
    u = jnp.mean(x, axis=1, keepdims=True)            # (Nb, 1, T) mean over channels
    d = x - u
    s = jnp.mean(d * d, axis=1, keepdims=True)        # biased variance over channels
    t = d * jax.lax.rsqrt(s + eps)                    # lane-aligned (1,1,T) broadcast
    w = w_ref[...].astype(jnp.float32)[None, :, :]    # (1, C, 1) per-sublane constants
    b = b_ref[...].astype(jnp.float32)[None, :, :]
    o_ref[...] = (t * w + b).astype(o_ref.dtype)


def _tpu_limits():
    """(physical VMEM bytes per core, TensorCores per chip) with safe fallbacks."""
    vmem_bytes = 64 * 1024 * 1024          # most constrained case (v7x per-TC)
    n_cores = 1
    try:
        vmem_bytes = int(pltpu.get_tpu_info().vmem_capacity_bytes)
    except Exception:
        pass
    try:
        kind = jax.devices()[0].device_kind.lower()
        if "v7" in kind:                   # v7x: 2 TensorCores per chip
            n_cores = 2
    except Exception:
        pass
    return vmem_bytes, n_cores


def _pick_block(N, C, HW, itemsize, vmem_bytes, n_cores):
    """Choose (Nb, tile_hw, safe_cap): block = (Nb, C, tile_hw), tile_hw % 128 == 0."""
    q = -(-HW // 128)                      # 128-lane groups (last one may be ragged)

    safe_cap = min((vmem_bytes * 3) // 4, 96 * 1024 * 1024)
    slack = 2 * 1024 * 1024
    # Per grid step VMEM ~= 4 * block (double-buffered in + out, input dtype)
    #                      + 3 * block_f32 (kernel temporaries: x upcast, d, t).
    denom = 4.0 + 3.0 * (4.0 / itemsize)
    max_block_bytes = max(512 * 1024, int((safe_cap - slack) / denom))

    row_bytes = C * 128 * itemsize         # one 128-lane group of one image
    tile_units = max(1, min(q, max_block_bytes // max(row_bytes, 1)))

    nb = 1
    if tile_units >= q:
        # Whole spatial extent fits in one tile: batch images to fill the block
        # (late-stage 14x14 / 7x7 feature maps would otherwise move <1 MiB/step).
        tile_units = q
        per_image = q * row_bytes
        nb = int(min(N, max(1, max_block_bytes // max(per_image, 1))))

    if n_cores > 1:
        # 2-TC chips only: keep >= 2 grid points per TensorCore, as long as that
        # doesn't shrink tiles below the ~512-lane roofline knee.
        min_pts = 2 * n_cores

        def pts(nb_, tu_):
            return (-(-N // nb_)) * (-(-q // tu_))

        while pts(nb, tile_units) < min_pts and nb > 1:
            nb = max(1, nb // 2)
        while pts(nb, tile_units) < min_pts and tile_units > 4:
            tile_units = max(4, tile_units // 2)

    return nb, tile_units * 128, safe_cap


def layernorm2d(x: jax.Array, weight: jax.Array, bias: jax.Array,
                eps: float = 1e-6) -> jax.Array:
    """x: (N, C, H, W); weight, bias: (C,). LayerNorm over the channel axis."""
    N, C, H, W = x.shape
    HW = H * W
    itemsize = jnp.dtype(x.dtype).itemsize

    vmem_bytes, n_cores = _tpu_limits()
    nb, tile_hw, safe_cap = _pick_block(N, C, HW, itemsize, vmem_bytes, n_cores)

    # No padding: ragged edge blocks are OOB-padded on read and masked on store.
    # Each (image, spatial) column is normalized independently, so garbage in
    # padded lanes never touches valid columns.
    x3 = x.reshape(N, C, HW)
    w2 = weight.reshape(C, 1)
    b2 = bias.reshape(C, 1)

    block_in = nb * C * tile_hw * itemsize
    block_f32 = nb * C * tile_hw * 4
    need = 4 * block_in + 3 * block_f32 + 2 * 1024 * 1024
    vmem_limit = int(min(safe_cap, max(32 * 1024 * 1024, need)))

    grid = (pl.cdiv(N, nb), pl.cdiv(HW, tile_hw))

    cost = pl.CostEstimate(
        flops=8 * N * C * HW,
        transcendentals=N * HW,
        bytes_accessed=2 * N * C * HW * itemsize + 2 * C * 4,
    )

    out = pl.pallas_call(
        functools.partial(_layernorm2d_kernel, eps=eps),
        out_shape=jax.ShapeDtypeStruct((N, C, HW), x.dtype),
        grid=grid,
        in_specs=[
            pl.BlockSpec((nb, C, tile_hw), lambda n, t: (n, 0, t)),
            pl.BlockSpec((C, 1), lambda n, t: (0, 0)),
            pl.BlockSpec((C, 1), lambda n, t: (0, 0)),
        ],
        out_specs=pl.BlockSpec((nb, C, tile_hw), lambda n, t: (n, 0, t)),
        compiler_params=pltpu.CompilerParams(
            dimension_semantics=("parallel", "parallel"),
            vmem_limit_bytes=vmem_limit),
        cost_estimate=cost,
    )(x3, w2, b2)

    return out.reshape(N, C, H, W)


def layernorm2d_ref(x, weight, bias, eps=1e-6):
    u = jnp.mean(x, axis=1, keepdims=True)
    s = jnp.mean((x - u) ** 2, axis=1, keepdims=True)
    y = (x - u) / jnp.sqrt(s + eps)
    return weight[None, :, None, None] * y + bias[None, :, None, None]


if __name__ == "__main__":
    key = jax.random.PRNGKey(0)

    # Primary test: module's default init (weight=ones, bias=zeros).
    N, C, H, W = 2, 4, 16, 16
    x = jax.random.normal(key, (N, C, H, W), dtype=jnp.float32)
    weight = jnp.ones((C,), dtype=jnp.float32)
    bias = jnp.zeros((C,), dtype=jnp.float32)

    out = jax.block_until_ready(layernorm2d(x, weight, bias))
    ref = layernorm2d_ref(x, weight, bias)
    assert out.shape == (N, C, H, W)
    assert jnp.allclose(out, ref, atol=1e-5, rtol=1e-5), "mismatch vs reference (test 1)"

    # Secondary test: non-128-multiple H*W (exercises the ragged edge block)
    # and non-trivial affine params.
    k1, k2, k3 = jax.random.split(key, 3)
    N2, C2, H2, W2 = 1, 8, 10, 10
    x2 = jax.random.normal(k1, (N2, C2, H2, W2), dtype=jnp.float32)
    w2 = jax.random.normal(k2, (C2,), dtype=jnp.float32)
    b2 = jax.random.normal(k3, (C2,), dtype=jnp.float32)
    out2 = jax.block_until_ready(layernorm2d(x2, w2, b2))
    ref2 = layernorm2d_ref(x2, w2, b2)
    assert jnp.allclose(out2, ref2, atol=1e-5, rtol=1e-5), "mismatch vs reference (test 2)"

    # Third test: many small feature maps (exercises Nb>1 batch blocking).
    k4 = jax.random.split(key, 4)[3]
    N3, C3, H3, W3 = 16, 32, 7, 7
    x3 = jax.random.normal(k4, (N3, C3, H3, W3), dtype=jnp.float32)
    w3 = jnp.ones((C3,), dtype=jnp.float32)
    b3 = jnp.zeros((C3,), dtype=jnp.float32)
    out3 = jax.block_until_ready(layernorm2d(x3, w3, b3))
    ref3 = layernorm2d_ref(x3, w3, b3)
    assert jnp.allclose(out3, ref3, atol=1e-5, rtol=1e-5), "mismatch vs reference (test 3)"

    print("KERNEL_OK")
</pallas_src>

<mosaic_0001>
module attributes {stable_mosaic.version = 11 : i64} {
  func.func @_layernorm2d_kernel(%arg0: i32, %arg1: i32, %arg2: memref<2x4x256xf32, #tpu.memory_space<vmem>>, %arg3: memref<4x1xf32, #tpu.memory_space<vmem>>, %arg4: memref<4x1xf32, #tpu.memory_space<vmem>>, %arg5: memref<2x4x256xf32, #tpu.memory_space<vmem>>) attributes {dimension_semantics = [#tpu.dimension_semantics<parallel>, #tpu.dimension_semantics<parallel>], iteration_bounds = array<i64: 1, 1>, scalar_prefetch = 0 : i64, scratch_operands = 0 : i64, tpu.core_type = #tpu.core_type<tc>, window_params = [{transform_indices = @transform_0, window_bounds = array<i64: 2, 4, 256>}, {pipeline_mode = #tpu.pipeline_mode<synchronous>, transform_indices = @transform_1, window_bounds = array<i64: 4, 1>}, {pipeline_mode = #tpu.pipeline_mode<synchronous>, transform_indices = @transform_2, window_bounds = array<i64: 4, 1>}, {transform_indices = @transform_3, window_bounds = array<i64: 2, 4, 256>}]} {
    %c0 = arith.constant 0 : index
    %c0_0 = arith.constant 0 : index
    %c0_1 = arith.constant 0 : index
    %0 = vector.load %arg2[%c0, %c0_0, %c0_1] : memref<2x4x256xf32, #tpu.memory_space<vmem>>, vector<2x4x256xf32>
    %cst = arith.constant dense<0.000000e+00> : vector<2x256xf32>
    %1 = vector.multi_reduction <add>, %0, %cst [1] : vector<2x4x256xf32> to vector<2x256xf32>
    %2 = vector.shape_cast %1 : vector<2x256xf32> to vector<2x1x256xf32>
    %cst_2 = arith.constant 4.000000e+00 : f32
    %3 = vector.broadcast %cst_2 : f32 to vector<2x1x256xf32>
    %4 = arith.divf %2, %3 : vector<2x1x256xf32>
    %5 = vector.broadcast %4 : vector<2x1x256xf32> to vector<2x4x256xf32>
    %6 = arith.subf %0, %5 : vector<2x4x256xf32>
    %7 = arith.mulf %6, %6 : vector<2x4x256xf32>
    %cst_3 = arith.constant dense<0.000000e+00> : vector<2x256xf32>
    %8 = vector.multi_reduction <add>, %7, %cst_3 [1] : vector<2x4x256xf32> to vector<2x256xf32>
    %9 = vector.shape_cast %8 : vector<2x256xf32> to vector<2x1x256xf32>
    %cst_4 = arith.constant 4.000000e+00 : f32
    %10 = vector.broadcast %cst_4 : f32 to vector<2x1x256xf32>
    %11 = arith.divf %9, %10 : vector<2x1x256xf32>
    %cst_5 = arith.constant 9.99999997E-7 : f32
    %12 = vector.broadcast %cst_5 : f32 to vector<2x1x256xf32>
    %13 = arith.addf %11, %12 : vector<2x1x256xf32>
    %14 = math.rsqrt %13 : vector<2x1x256xf32>
    %15 = vector.broadcast %14 : vector<2x1x256xf32> to vector<2x4x256xf32>
    %16 = arith.mulf %6, %15 : vector<2x4x256xf32>
    %c0_6 = arith.constant 0 : index
    %c0_7 = arith.constant 0 : index
    %17 = vector.load %arg3[%c0_6, %c0_7] : memref<4x1xf32, #tpu.memory_space<vmem>>, vector<4x1xf32>
    %18 = vector.shape_cast %17 : vector<4x1xf32> to vector<1x4x1xf32>
    %c0_8 = arith.constant 0 : index
    %c0_9 = arith.constant 0 : index
    %19 = vector.load %arg4[%c0_8, %c0_9] : memref<4x1xf32, #tpu.memory_space<vmem>>, vector<4x1xf32>
    %20 = vector.shape_cast %19 : vector<4x1xf32> to vector<1x4x1xf32>
    %21 = vector.broadcast %18 : vector<1x4x1xf32> to vector<2x4x256xf32>
    %22 = arith.mulf %16, %21 : vector<2x4x256xf32>
    %23 = vector.broadcast %20 : vector<1x4x1xf32> to vector<2x4x256xf32>
    %24 = arith.addf %22, %23 : vector<2x4x256xf32>
    %c0_10 = arith.constant 0 : index
    %c0_11 = arith.constant 0 : index
    %c0_12 = arith.constant 0 : index
    %25 = vector.load %arg5[%c0_10, %c0_11, %c0_12] : memref<2x4x256xf32, #tpu.memory_space<vmem>>, vector<2x4x256xf32>
    tpu.vector_store %arg5[%c0_10, %c0_11, %c0_12], %24 {strides = array<i32>} : memref<2x4x256xf32, #tpu.memory_space<vmem>>, vector<2x4x256xf32>,
    return
  }
  func.func @transform_0(%arg0: i32, %arg1: i32) -> (i32, i32, i32) {
    %c0_i32 = arith.constant 0 : i32
    %c0_i32_0 = arith.constant 0 : i32
    return %arg0, %c0_i32, %arg1 : i32, i32, i32
  }
  func.func @transform_1(%arg0: i32, %arg1: i32) -> (i32, i32) {
    %c0_i32 = arith.constant 0 : i32
    %c0_i32_0 = arith.constant 0 : i32
    %c0_i32_1 = arith.constant 0 : i32
    return %c0_i32, %c0_i32_0 : i32, i32
  }
  func.func @transform_2(%arg0: i32, %arg1: i32) -> (i32, i32) {
    %c0_i32 = arith.constant 0 : i32
    %c0_i32_0 = arith.constant 0 : i32
    %c0_i32_1 = arith.constant 0 : i32
    return %c0_i32, %c0_i32_0 : i32, i32
  }
  func.func @transform_3(%arg0: i32, %arg1: i32) -> (i32, i32, i32) {
    %c0_i32 = arith.constant 0 : i32
    %c0_i32_0 = arith.constant 0 : i32
    return %arg0, %c0_i32, %arg1 : i32, i32, i32
  }
}

</mosaic_0001>

<llo_original>
// kernel: tpu_custom_call.1
$region0: #{tpu_custom_call.1}
  #allocation0 [shape = 'u32[]', space=smem, size = 0x4, offset = 0x4, fixed_abs, tag = 'smem constant byte address 0x4 - core index']
  #allocation1 [shape = 'u32[72,128]{1,0:T(1,128)}', space=vmem, size = 0x9000, scoped, tag = 'internal scratch']
  %s0 = inlined_call_operand.hbm [shape: f32[2,4,256], index: 0, kind: input, shape index: {}]
  %s1 = inlined_call_operand.vmem [shape: f32[4,1], index: 1, kind: input, shape index: {}]
  %s2 = inlined_call_operand.vmem [shape: f32[4,1], index: 2, kind: input, shape index: {}]
  %s3 = inlined_call_operand.hbm [shape: f32[2,4,256], index: 3, kind: output, shape index: {}]
  %s4 = sld [smem:[#allocation0]]
  $region26: #{tpu_custom_call.1} parent=0
    _
  %s6 = ssub.s32 1, %s4
  %s7 = scalar_select 0, %s6, %s4
  $region1: #{tpu_custom_call.1} parent=0
    #allocation2 [shape = 'u8[8192]{0}', space=vmem, size = 0x2000, scoped, tag = 'input window, operand 0, single buffered']
    #allocation3 [shape = 's32[1]{0}', space=sflag, size = 0x4, scoped, tag = 'scoped memory for tpu_custom_call.1']
    #allocation4 [shape = 's32[1]{0}', space=sflag, size = 0x4, scoped, tag = 'scoped memory for tpu_custom_call.1']
    #allocation5 [shape = 'u8[8192]{0}', space=vmem, size = 0x2000, scoped, tag = 'output window, operand 0, single buffered']
    %8 = vsyncpa [#allocation3], 0
    %9 = vsyncpa [#allocation4], 0
    // Predicated region
    $region2: #{tpu_custom_call.1} parent=1 // pred_check
      _
    $region3: #{tpu_custom_call.1} parent=1 // pred_check_branch
      %11 = sbr.rel (0) target = $region5
    $region4: #{tpu_custom_call.1} parent=1 // pred_region
      %13 = vsyncadd [#allocation3], 0
      %s14 = sshll.u32 %s0, 4
      %s15 = int_to_ptr.hbm [resolvable:$true] %s14
      %s16 = sshll.u32 [#allocation2], 4
      %s17 = int_to_ptr.vmem [resolvable:$true] %s16
      %22 = dma.hbm_to_vmem [thread:$0]  %s15, 256, %s17, [#allocation3], 128, 128, 8
    $region5: #{tpu_custom_call.1} parent=1 // pred_fallthru
      _
    // Predicated region
    $region6: #{tpu_custom_call.1} parent=1 // pred_check
      _
    $region7: #{tpu_custom_call.1} parent=1 // pred_check_branch
      %24 = sbr.rel (0) target = $region9
    $region8: #{tpu_custom_call.1} parent=1 // pred_region
      _
    $region9: #{tpu_custom_call.1} parent=1 // pred_fallthru
      _
    // Predicated region
    $region10: #{tpu_custom_call.1} parent=1 // pred_check
      _
    $region11: #{tpu_custom_call.1} parent=1 // pred_check_branch
      %26 = sbr.rel (0) target = $region13
    $region12: #{tpu_custom_call.1} parent=1 // pred_region
      _
    $region13: #{tpu_custom_call.1} parent=1 // pred_fallthru
      _
    // Predicated region
    $region14: #{tpu_custom_call.1} parent=1 // pred_check
      _
    $region15: #{tpu_custom_call.1} parent=1 // pred_check_branch
      %28 = sbr.rel (0) target = $region17
    $region16: #{tpu_custom_call.1} parent=1 // pred_region
      %30 = dma.done [#allocation3], 256
    $region17: #{tpu_custom_call.1} parent=1 // pred_fallthru
      _
    %v31 = vld [vmem:[#allocation2] sm:$0xff]
    %v32 = vld [vmem:[#allocation2 + $0x8] sm:$0xff]
    %35 = vst [vmem:[#allocation1] ss:$2 sm:$0xff] %v31
    %v36 = vld.sshfl [vmem:[#allocation1] sm:$0xff pattern:$0x75316420]
    %v37 = vld.sshfl [vmem:[#allocation1 + $0x8] sm:$0xff pattern:$0x75316420]
    %s38 = scalar_lea.vmem [#allocation1], 16
    %39 = vst [vmem:[%s38] ss:$2 sm:$0xff] %v32
    %v40 = vld.sshfl [vmem:[#allocation1 + $0x10] sm:$0xff pattern:$0x75316420]
    %v41 = vld.sshfl [vmem:[#allocation1 + $0x18] sm:$0xff pattern:$0x75316420]
    %vm46 = vcmask 1043456
    %v47 = vsel %vm46, %v36, 0.0
    %v48 = vrot.slane %v47, 4
    %v49 = vadd.f32 %v47, %v48
    %v50 = vrot.slane %v49, 2
    %v51 = vadd.f32 %v49, %v50
    %v52 = vrot.slane %v51, 1
    %v53 = vadd.f32 %v51, %v52
    %v54 = vsel %vm46, %v37, 0.0
    %v55 = vrot.slane %v54, 4
    %v56 = vadd.f32 %v54, %v55
    %v57 = vrot.slane %v56, 2
    %v58 = vadd.f32 %v56, %v57
    %v59 = vrot.slane %v58, 1
    %v60 = vadd.f32 %v58, %v59
    %v61 = vsel %vm46, %v40, 0.0
    %v62 = vrot.slane %v61, 4
    %v63 = vadd.f32 %v61, %v62
    %v64 = vrot.slane %v63, 2
    %v65 = vadd.f32 %v63, %v64
    %v66 = vrot.slane %v65, 1
    %v67 = vadd.f32 %v65, %v66
    %v68 = vsel %vm46, %v41, 0.0
    %v69 = vrot.slane %v68, 4
    %v70 = vadd.f32 %v68, %v69
    %v71 = vrot.slane %v70, 2
    %v72 = vadd.f32 %v70, %v71
    %v73 = vrot.slane %v72, 1
    %v74 = vadd.f32 %v72, %v73
    %v75 = vrcp.pop 4.0
    %v76 = vmul.f32 4.0, %v75
    %v77 = vsub.f32 1.0, %v76
    %v78 = vmul.f32 %v75, %v77
    %v79 = vadd.f32 %v75, %v78
    %vm80 = vweird.f32 %v75
    %v81 = vsel %vm80, %v75, %v79
    %v82 = vmul.f32 %v53, %v81
    %v83 = vmul.f32 %v60, %v81
    %v84 = vmul.f32 %v67, %v81
    %v85 = vmul.f32 %v74, %v81
    %v90 = vrot.slane %v83, 4
    %v91 = vrot.slane %v85, 4
    %v92 = vsel %vm46, %v82, %v90
    %v93 = vsel %vm46, %v84, %v91
    %v96 = vsub.f32 %v31, %v92
    %v97 = vsub.f32 %v32, %v93
    %v98 = vmul.f32 %v96, %v96
    %v99 = vmul.f32 %v97, %v97
    %102 = vst [vmem:[#allocation1] ss:$2 sm:$0xff] %v98
    %v103 = vld.sshfl [vmem:[#allocation1] sm:$0xff pattern:$0x75316420]
    %v104 = vld.sshfl [vmem:[#allocation1 + $0x8] sm:$0xff pattern:$0x75316420]
    %s105 = scalar_lea.vmem [#allocation1], 16
    %106 = vst [vmem:[%s105] ss:$2 sm:$0xff] %v99
    %v107 = vld.sshfl [vmem:[#allocation1 + $0x10] sm:$0xff pattern:$0x75316420]
    %v108 = vld.sshfl [vmem:[#allocation1 + $0x18] sm:$0xff pattern:$0x75316420]
    %v113 = vsel %vm46, %v103, 0.0
    %v114 = vrot.slane %v113, 4
    %v115 = vadd.f32 %v113, %v114
    %v116 = vrot.slane %v115, 2
    %v117 = vadd.f32 %v115, %v116
    %v118 = vrot.slane %v117, 1
    %v119 = vadd.f32 %v117, %v118
    %v120 = vsel %vm46, %v104, 0.0
    %v121 = vrot.slane %v120, 4
    %v122 = vadd.f32 %v120, %v121
    %v123 = vrot.slane %v122, 2
    %v124 = vadd.f32 %v122, %v123
    %v125 = vrot.slane %v124, 1
    %v126 = vadd.f32 %v124, %v125
    %v127 = vsel %vm46, %v107, 0.0
    %v128 = vrot.slane %v127, 4
    %v129 = vadd.f32 %v127, %v128
    %v130 = vrot.slane %v129, 2
    %v131 = vadd.f32 %v129, %v130
    %v132 = vrot.slane %v131, 1
    %v133 = vadd.f32 %v131, %v132
    %v134 = vsel %vm46, %v108, 0.0
    %v135 = vrot.slane %v134, 4
    %v136 = vadd.f32 %v134, %v135
    %v137 = vrot.slane %v136, 2
    %v138 = vadd.f32 %v136, %v137
    %v139 = vrot.slane %v138, 1
    %v140 = vadd.f32 %v138, %v139
    %v141 = vmul.f32 %v119, %v81
    %v142 = vmul.f32 %v126, %v81
    %v143 = vmul.f32 %v133, %v81
    %v144 = vmul.f32 %v140, %v81
    %v145 = vadd.f32 %v141, 1e-06
    %v146 = vadd.f32 %v142, 1e-06
    %v147 = vadd.f32 %v143, 1e-06
    %v148 = vadd.f32 %v144, 1e-06
    %v149 = vrsqrt.pop %v145
    %v150 = vmul.f32 %v149, %v145
    %v151 = vmul.f32 %v150, %v149
    %v152 = vmul.f32 0.5, %v151
    %v153 = vsub.f32 1.5, %v152
    %v154 = vmul.f32 %v149, %v153
    %vm155 = vweird.f32 %v145
    %vm156 = vweird.f32 %v149
    %vm157 = vmor %vm155, %vm156
    %v158 = vsel %vm157, %v149, %v154
    %v159 = vrsqrt.pop %v146
    %v160 = vmul.f32 %v159, %v146
    %v161 = vmul.f32 %v160, %v159
    %v162 = vmul.f32 0.5, %v161
    %v163 = vsub.f32 1.5, %v162
    %v164 = vmul.f32 %v159, %v163
    %vm165 = vweird.f32 %v146
    %vm166 = vweird.f32 %v159
    %vm167 = vmor %vm165, %vm166
    %v168 = vsel %vm167, %v159, %v164
    %v169 = vrsqrt.pop %v147
    %v170 = vmul.f32 %v169, %v147
    %v171 = vmul.f32 %v170, %v169
    %v172 = vmul.f32 0.5, %v171
    %v173 = vsub.f32 1.5, %v172
    %v174 = vmul.f32 %v169, %v173
    %vm175 = vweird.f32 %v147
    %vm176 = vweird.f32 %v169
    %vm177 = vmor %vm175, %vm176
    %v178 = vsel %vm177, %v169, %v174
    %v179 = vrsqrt.pop %v148
    %v180 = vmul.f32 %v179, %v148
    %v181 = vmul.f32 %v180, %v179
    %v182 = vmul.f32 0.5, %v181
    %v183 = vsub.f32 1.5, %v182
    %v184 = vmul.f32 %v179, %v183
    %vm185 = vweird.f32 %v148
    %vm186 = vweird.f32 %v179
    %vm187 = vmor %vm185, %vm186
    %v188 = vsel %vm187, %v179, %v184
    %v193 = vrot.slane %v168, 4
    %v194 = vrot.slane %v188, 4
    %v195 = vsel %vm46, %v158, %v193
    %v196 = vsel %vm46, %v178, %v194
    %v199 = vmul.f32 %v96, %v195
    %v200 = vmul.f32 %v97, %v196
    %v201 = vld [vmem:[%s1] sm:$0xf]
    %v202 = vld [vmem:[%s2] sm:$0xf]
    %204 = vset.pattern.permute.xlu0 0
    %205 = vperm.xlu0 %204, %v201
    %v206 = vpop.permute.xlu0 %205
    %v208 = vunpack.c.l.s4 839922192
    %v209 = vunpack.c.0.s8 %v208
    %v210 = vperm.slane %v206, %v209
    %v212 = vmul.f32 %v199, %v210
    %v213 = vmul.f32 %v200, %v210
    %215 = vset.pattern.permute.xlu0 0
    %216 = vperm.xlu0 %215, %v202
    %v217 = vpop.permute.xlu0 %216
    %v219 = vunpack.c.l.s4 839922192
    %v220 = vunpack.c.0.s8 %v219
    %v221 = vperm.slane %v217, %v220
    %v223 = vadd.f32 %v212, %v221
    %v224 = vadd.f32 %v213, %v221
    %225 = vst [vmem:[#allocation5] sm:$0xff] %v223
    %226 = vst [vmem:[#allocation5 + $0x8] sm:$0xff] %v224
    // Predicated region
    $region18: #{tpu_custom_call.1} parent=1 // pred_check
      _
    $region19: #{tpu_custom_call.1} parent=1 // pred_check_branch
      %228 = sbr.rel (0) target = $region21
    $region20: #{tpu_custom_call.1} parent=1 // pred_region
      %230 = vsyncadd [#allocation4], 0
      %s231 = sshll.u32 [#allocation5], 4
      %s232 = int_to_ptr.vmem [resolvable:$true] %s231
      %s233 = sshll.u32 %s3, 4
      %s234 = int_to_ptr.hbm [resolvable:$true] %s233
      %239 = dma.vmem_to_hbm [thread:$0]  %s232, 256, %s234, [#allocation4], 128, 128, 8
    $region21: #{tpu_custom_call.1} parent=1 // pred_fallthru
      _
    // Predicated region
    $region22: #{tpu_custom_call.1} parent=1 // pred_check
      _
    $region23: #{tpu_custom_call.1} parent=1 // pred_check_branch
      %241 = sbr.rel (0) target = $region25
    $region24: #{tpu_custom_call.1} parent=1 // pred_region
      %243 = dma.done [#allocation4], 256
    $region25: #{tpu_custom_call.1} parent=1 // pred_fallthru
      _
    %244 = vsyncpa [#allocation3], 1
    %245 = vsyncpa [#allocation4], 1

</llo_original>
